<compile_context>
chip_gen: v6e
topology: v6e:2x2x1
jax: 0.10.0
libtpu: 0.0.40
codegen_flags: <defaults>
</compile_context>

<pallas_src>
import jax
import jax.numpy as jnp
from jax.experimental import pallas as pl
from jax.experimental.pallas import tpu as pltpu


# -----------------------------------------------------------------------------
# Kernel: fused spatial squeeze-and-excitation on a (C, T) spatial tile
# -----------------------------------------------------------------------------
def _spatial_se_kernel(x_ref, w_ref, b_ref, o_ref):
    # x_ref: (1, C, T)  activations, channels on sublanes, spatial on lanes
    # w_ref: (C, 1)     1x1 conv weight (single output channel)
    # b_ref: (1, 1)     1x1 conv bias
    # o_ref: (1, C, T)
    x = x_ref[0]                                   # (C, T) f32
    w = w_ref[...]                                 # (C, 1), lane-broadcast
    # 1x1 conv to one channel == per-pixel weighted channel sum.
    # VPU multiply + XLU sublane reduction; no N=1 MXU matmul.
    logits = jnp.sum(x * w, axis=0, keepdims=True) + b_ref[0, 0]   # (1, T)
    gate = jax.nn.sigmoid(logits)                                  # (1, T) EUP
    o_ref[0] = x * gate                                            # (C, T)


def _pick_spatial_tile(hw, channels, vmem_budget_bytes=12 << 20):
    """Largest lane-dense tile (multiple of 128) dividing hw that keeps the
    double-buffered in+out VMEM footprint (4 * C * T * 4 bytes) within budget.
    Falls back to the full spatial dim (always legal) when hw is small or has
    no suitable divisor."""
    # 4 buffers (in x2, out x2) of C*T f32 elements.
    cap = vmem_budget_bytes // (16 * max(channels, 1))
    cap = min(cap, 8192)                 # past ~1-8K lanes gains plateau
    if hw <= cap:
        return hw                        # full-dim block is always legal
    t = cap - (cap % 128)
    while t >= 128:
        if hw % t == 0:
            return t
        t -= 128
    return hw                            # fallback: no tiling


def spatial_se(x_nchw, conv_w, conv_b):
    """SpatialSE forward.

    x_nchw: (B, C, H, W) float32
    conv_w: (1, C, 1, 1) float32   (nn.Conv2d(channels, 1, kernel_size=1).weight)
    conv_b: (1,)         float32   (its bias)
    returns (B, C, H, W) float32 == x * sigmoid(conv1x1(x))
    """
    B, C, H, W = x_nchw.shape
    HW = H * W
    T = _pick_spatial_tile(HW, C)

    x = x_nchw.reshape(B, C, HW).astype(jnp.float32)      # free reshape (NCHW)
    w2 = conv_w.reshape(C, 1).astype(jnp.float32)
    b2 = conv_b.reshape(1, 1).astype(jnp.float32)

    out = pl.pallas_call(
        _spatial_se_kernel,
        out_shape=jax.ShapeDtypeStruct((B, C, HW), jnp.float32),
        grid_spec=pltpu.PrefetchScalarGridSpec(
            num_scalar_prefetch=0,
            grid=(B, HW // T),
            in_specs=[
                pl.BlockSpec((1, C, T), lambda bi, si: (bi, 0, si)),
                pl.BlockSpec((C, 1), lambda bi, si: (0, 0)),
                pl.BlockSpec((1, 1), lambda bi, si: (0, 0)),
            ],
            out_specs=pl.BlockSpec((1, C, T), lambda bi, si: (bi, 0, si)),
        ),
        compiler_params=pltpu.CompilerParams(
            dimension_semantics=("parallel", "parallel")),
    )(x, w2, b2)

    return out.reshape(B, C, H, W)


# -----------------------------------------------------------------------------
# Pure-JAX reference (mirrors the PyTorch module)
# -----------------------------------------------------------------------------
def reference_forward(x, conv_w, conv_b):
    # y = sigmoid(Conv2d(C, 1, k=1)(x)); return x * y
    logits = jnp.einsum("bchw,c->bhw", x, conv_w.reshape(-1)) + conv_b[0]
    gate = jax.nn.sigmoid(logits)[:, None, :, :]           # (B, 1, H, W)
    return x * gate


if __name__ == "__main__":
    B, C, H, W = 2, 4, 16, 16
    key = jax.random.PRNGKey(0)
    kx, kw, kb = jax.random.split(key, 3)
    x = jax.random.normal(kx, (B, C, H, W), jnp.float32)
    conv_w = jax.random.normal(kw, (1, C, 1, 1), jnp.float32) * 0.2
    conv_b = jax.random.normal(kb, (1,), jnp.float32) * 0.2

    out = spatial_se(x, conv_w, conv_b)
    out = jax.block_until_ready(out)

    ref = reference_forward(x, conv_w, conv_b)
    assert out.shape == (B, C, H, W), out.shape
    assert jnp.allclose(out, ref, atol=1e-5, rtol=1e-5), (
        float(jnp.max(jnp.abs(out - ref))))
    print("KERNEL_OK")
</pallas_src>

<mosaic_0001>
module attributes {stable_mosaic.version = 11 : i64} {
  func.func @_spatial_se_kernel(%arg0: i32, %arg1: i32, %arg2: memref<1x4x256xf32, #tpu.memory_space<vmem>>, %arg3: memref<4x1xf32, #tpu.memory_space<vmem>>, %arg4: memref<1x1xf32, #tpu.memory_space<vmem>>, %arg5: memref<1x4x256xf32, #tpu.memory_space<vmem>>) attributes {dimension_semantics = [#tpu.dimension_semantics<parallel>, #tpu.dimension_semantics<parallel>], iteration_bounds = array<i64: 2, 1>, scalar_prefetch = 0 : i64, scratch_operands = 0 : i64, tpu.core_type = #tpu.core_type<tc>, window_params = [{transform_indices = @transform_0, window_bounds = array<i64: 1, 4, 256>}, {pipeline_mode = #tpu.pipeline_mode<synchronous>, transform_indices = @transform_1, window_bounds = array<i64: 4, 1>}, {pipeline_mode = #tpu.pipeline_mode<synchronous>, transform_indices = @transform_2, window_bounds = array<i64: 1, 1>}, {transform_indices = @transform_3, window_bounds = array<i64: 1, 4, 256>}]} {
    %c0 = arith.constant 0 : index
    %c0_0 = arith.constant 0 : index
    %c0_1 = arith.constant 0 : index
    %0 = vector.load %arg2[%c0, %c0_0, %c0_1] : memref<1x4x256xf32, #tpu.memory_space<vmem>>, vector<1x4x256xf32>
    %1 = vector.shape_cast %0 : vector<1x4x256xf32> to vector<4x256xf32>
    %c0_2 = arith.constant 0 : index
    %c0_3 = arith.constant 0 : index
    %2 = vector.load %arg3[%c0_2, %c0_3] : memref<4x1xf32, #tpu.memory_space<vmem>>, vector<4x1xf32>
    %3 = vector.broadcast %2 : vector<4x1xf32> to vector<4x256xf32>
    %4 = arith.mulf %1, %3 : vector<4x256xf32>
    %cst = arith.constant dense<0.000000e+00> : vector<256xf32>
    %5 = vector.multi_reduction <add>, %4, %cst [0] : vector<4x256xf32> to vector<256xf32>
    %6 = vector.shape_cast %5 : vector<256xf32> to vector<1x256xf32>
    %c0_4 = arith.constant 0 : index
    %c0_5 = arith.constant 0 : index
    %7 = vector.load %arg4[%c0_4, %c0_5] : memref<1x1xf32, #tpu.memory_space<vmem>>, vector<1x1xf32>
    %8 = vector.extract %7[0, 0] : f32 from vector<1x1xf32>
    %9 = vector.broadcast %8 : f32 to vector<1x256xf32>
    %10 = arith.addf %6, %9 : vector<1x256xf32>
    %11 = arith.negf %10 : vector<1x256xf32>
    %12 = math.exp %11 : vector<1x256xf32>
    %cst_6 = arith.constant 1.000000e+00 : f32
    %13 = vector.broadcast %cst_6 : f32 to vector<1x256xf32>
    %14 = arith.addf %13, %12 : vector<1x256xf32>
    %15 = arith.divf %13, %14 : vector<1x256xf32>
    %16 = vector.broadcast %15 : vector<1x256xf32> to vector<4x256xf32>
    %17 = arith.mulf %1, %16 : vector<4x256xf32>
    %c0_7 = arith.constant 0 : index
    %c0_8 = arith.constant 0 : index
    %c0_9 = arith.constant 0 : index
    %18 = vector.load %arg5[%c0_7, %c0_8, %c0_9] : memref<1x4x256xf32, #tpu.memory_space<vmem>>, vector<1x4x256xf32>
    %19 = vector.shape_cast %18 : vector<1x4x256xf32> to vector<4x256xf32>
    %20 = vector.shape_cast %17 : vector<4x256xf32> to vector<1x4x256xf32>
    tpu.vector_store %arg5[%c0_7, %c0_8, %c0_9], %20 {strides = array<i32>} : memref<1x4x256xf32, #tpu.memory_space<vmem>>, vector<1x4x256xf32>,
    return
  }
  func.func @transform_0(%arg0: i32, %arg1: i32) -> (i32, i32, i32) {
    %c0_i32 = arith.constant 0 : i32
    %c0_i32_0 = arith.constant 0 : i32
    return %arg0, %c0_i32, %arg1 : i32, i32, i32
  }
  func.func @transform_1(%arg0: i32, %arg1: i32) -> (i32, i32) {
    %c0_i32 = arith.constant 0 : i32
    %c0_i32_0 = arith.constant 0 : i32
    %c0_i32_1 = arith.constant 0 : i32
    return %c0_i32, %c0_i32_0 : i32, i32
  }
  func.func @transform_2(%arg0: i32, %arg1: i32) -> (i32, i32) {
    %c0_i32 = arith.constant 0 : i32
    %c0_i32_0 = arith.constant 0 : i32
    %c0_i32_1 = arith.constant 0 : i32
    return %c0_i32, %c0_i32_0 : i32, i32
  }
  func.func @transform_3(%arg0: i32, %arg1: i32) -> (i32, i32, i32) {
    %c0_i32 = arith.constant 0 : i32
    %c0_i32_0 = arith.constant 0 : i32
    return %arg0, %c0_i32, %arg1 : i32, i32, i32
  }
}

</mosaic_0001>

<llo_original>
// kernel: tpu_custom_call.1
$region0: #{tpu_custom_call.1}
  #allocation0 [shape = 'u32[]', space=smem, size = 0x4, offset = 0x4, fixed_abs, tag = 'smem constant byte address 0x4 - core index']
  #allocation1 [shape = 'u32[144,128]{1,0:T(1,128)}', space=vmem, size = 0x12000, scoped, tag = 'internal scratch']
  #allocation2 [shape = 'f32[1,1]{1,0:T(1,128)S(1)}', space=vmem, size = 0x200, scoped, tag = 'scoped memory for tpu_custom_call.1']
  %s0 = inlined_call_operand.hbm [shape: f32[2,4,256], index: 0, kind: input, shape index: {}]
  %s1 = inlined_call_operand.vmem [shape: f32[4,1], index: 1, kind: input, shape index: {}]
  %s2 = inlined_call_operand.<no memory space> [shape: f32[1,1], index: 2, kind: input, shape index: {}]
  %s3 = inlined_call_operand.hbm [shape: f32[2,4,256], index: 3, kind: output, shape index: {}]
  %s4 = sld [smem:[#allocation0]]
  $region49: #{tpu_custom_call.1} parent=0
    _
  %s6 = ssub.s32 1, %s4
  %s7 = scalar_select 0, %s6, %s4
  %v8 = vstv %s2
  %9 = vst [vmem:[#allocation2] sm:$0x1] %v8
  $region1: #{tpu_custom_call.1} parent=0
    #allocation3 [shape = 'u8[8192]{0}', space=vmem, size = 0x2000, scoped, tag = 'input window, operand 0']
    #allocation4 [shape = 's32[2]{0}', space=sflag, size = 0x8, scoped, tag = 'scoped memory for tpu_custom_call.1']
    #allocation5 [shape = 's32[2]{0}', space=sflag, size = 0x8, scoped, tag = 'scoped memory for tpu_custom_call.1']
    #allocation6 [shape = 'u8[8192]{0}', space=vmem, size = 0x2000, scoped, tag = 'output window, operand 0']
    %10 = vsyncpa [#allocation4], 0
    %s11 = scalar_lea.sflag [#allocation4], 1
    %12 = vsyncpa %s11, 0
    %13 = vsyncpa [#allocation5], 0
    %s14 = scalar_lea.sflag [#allocation5], 1
    %15 = vsyncpa %s14, 0
    loop: start=0, step=1, limit=4
    $region2: #{tpu_custom_call.1} parent=1 // loop_pre_header
      _
    $region3: #{tpu_custom_call.1} parent=1 // loop_header
      %s17 = sphi 0, %s21
      %p18 = scmp.ge.s32.totalorder %s17, 4
      %s24 = sphi 0, %s36
      %s25 = sphi 0, %s32
      %s26 = sphi 0, %s24
      %s27 = sphi 0, %s25
      %s28 = sphi 0, %s26
      %s29 = sphi 0, %s27
      %s41 = sphi 0, %s43
      %s44 = sphi 0, %s41
      %s45 = sphi 0, %s44
      %s61 = sphi 0, %s45
      %s65 = sphi 0, %s65
      %s67 = sphi 0, %s65
      %s68 = sphi 0, %s67
      %s82 = sphi 0, %s68
      %s86 = sphi 0, %s86
      %s88 = sphi 0, %s86
      %s89 = sphi 0, %s88
      %s103 = sphi 0, %s89
      %s111 = sphi 0, %s113
      %s114 = sphi 0, %s111
      %s115 = sphi 0, %s114
      %s131 = sphi 0, %s115
    $region4: #{tpu_custom_call.1} parent=1 // loop_header_branch
      %20 = sbr.rel (%p18) target = $region8
    $region5: #{tpu_custom_call.1} parent=1 // loop_body
      %s22 = ssub.s32 %s17, 1
      %s23 = ssub.s32 %s17, 2
      %s30 = sadd.s32 1, %s25
      %p31 = scmp.ge.s32.totalorder %s30, 1
      %s32 = scalar_select %p31, 0, %s30
      %s33 = sadd.s32 1, %s24
      %s34 = scalar_select %p31, %s33, %s24
      %p35 = scmp.ge.s32.totalorder %s34, 2
      %s36 = scalar_select %p35, 0, %s34
      %s37 = ssub.s32 %s24, %s36
      %s38 = ssub.s32 %s25, %s32
      %s39 = sor.u32 %s37, %s38
      %p40 = scmp.eq.s32.totalorder %s39, 0
      %s42 = sadd.s32 %s41, 1
      %s43 = scalar_select %p40, %s41, %s42
      %p46 = pneg %p40
      %p47 = scmp.eq.s32.totalorder %s17, 1
      %p48 = por %p46, %p47
      %p49 = scmp.ne.s32.totalorder %s41, %s44
      %p50 = scmp.eq.s32.totalorder %s17, 0
      %p51 = por %p49, %p50
      %p52 = scmp.ne.s32.totalorder %s41, %s44
      %p53 = scmp.eq.s32.totalorder %s22, 1
      %p54 = por %p52, %p53
      %p55 = scmp.ne.s32.totalorder %s44, %s45
      %p56 = scmp.eq.s32.totalorder %s22, 0
      %p57 = por %p55, %p56
      %p58 = scmp.ne.s32.totalorder %s44, %s45
      %p59 = scmp.eq.s32.totalorder %s23, 1
      %p60 = por %p58, %p59
      %p62 = scmp.ne.s32.totalorder %s45, %s61
      %p63 = scmp.eq.s32.totalorder %s23, 0
      %p64 = por %p62, %p63
      %s66 = sadd.s32 %s65, 1
      %p69 = scmp.eq.s32.totalorder %s17, 1
      %p70 = scmp.ne.s32.totalorder %s65, %s67
      %p71 = scmp.eq.s32.totalorder %s17, 0
      %p72 = por %p70, %p71
      %p73 = scmp.ne.s32.totalorder %s65, %s67
      %p74 = scmp.eq.s32.totalorder %s22, 1
      %p75 = por %p73, %p74
      %p76 = scmp.ne.s32.totalorder %s67, %s68
      %p77 = scmp.eq.s32.totalorder %s22, 0
      %p78 = por %p76, %p77
      %p79 = scmp.ne.s32.totalorder %s67, %s68
      %p80 = scmp.eq.s32.totalorder %s23, 1
      %p81 = por %p79, %p80
      %p83 = scmp.ne.s32.totalorder %s68, %s82
      %p84 = scmp.eq.s32.totalorder %s23, 0
      %p85 = por %p83, %p84
      %s87 = sadd.s32 %s86, 1
      %p90 = scmp.eq.s32.totalorder %s17, 1
      %p91 = scmp.ne.s32.totalorder %s86, %s88
      %p92 = scmp.eq.s32.totalorder %s17, 0
      %p93 = por %p91, %p92
      %p94 = scmp.ne.s32.totalorder %s86, %s88
      %p95 = scmp.eq.s32.totalorder %s22, 1
      %p96 = por %p94, %p95
      %p97 = scmp.ne.s32.totalorder %s88, %s89
      %p98 = scmp.eq.s32.totalorder %s22, 0
      %p99 = por %p97, %p98
      %p100 = scmp.ne.s32.totalorder %s88, %s89
      %p101 = scmp.eq.s32.totalorder %s23, 1
      %p102 = por %p100, %p101
      %p104 = scmp.ne.s32.totalorder %s89, %s103
      %p105 = scmp.eq.s32.totalorder %s23, 0
      %p106 = por %p104, %p105
      %s107 = ssub.s32 %s24, %s36
      %s108 = ssub.s32 %s25, %s32
      %s109 = sor.u32 %s107, %s108
      %p110 = scmp.eq.s32.totalorder %s109, 0
      %s112 = sadd.s32 %s111, 1
      %s113 = scalar_select %p110, %s111, %s112
      %p116 = pneg %p110
      %p117 = scmp.eq.s32.totalorder %s17, 1
      %p118 = por %p116, %p117
      %p119 = scmp.ne.s32.totalorder %s111, %s114
      %p120 = scmp.eq.s32.totalorder %s17, 0
      %p121 = por %p119, %p120
      %p122 = scmp.ne.s32.totalorder %s111, %s114
      %p123 = scmp.eq.s32.totalorder %s22, 1
      %p124 = por %p122, %p123
      %p125 = scmp.ne.s32.totalorder %s114, %s115
      %p126 = scmp.eq.s32.totalorder %s22, 0
      %p127 = por %p125, %p126
      %p128 = scmp.ne.s32.totalorder %s114, %s115
      %p129 = scmp.eq.s32.totalorder %s23, 1
      %p130 = por %p128, %p129
      %p132 = scmp.ne.s32.totalorder %s115, %s131
      %p133 = scmp.eq.s32.totalorder %s23, 0
      %p134 = por %p132, %p133
      %p135 = scmp.le.s32.totalorder 1, %s17
      %p136 = scmp.lt.s32.totalorder %s17, 3
      %p137 = pnand %p135, %p136
      %p138 = pneg %p137
      // Predicated region
      $region9: #{tpu_custom_call.1} parent=5 // pred_check
        _
      $region10: #{tpu_custom_call.1} parent=5 // pred_check_branch
        %140 = sbr.rel (%p137) target = $region12
      $region11: #{tpu_custom_call.1} parent=5 // pred_region
        %s141 = ssub.s32 %s17, 1
        // Predicated region
        $region13: #{tpu_custom_call.1} parent=11 // pred_check
          %p142 = pneg %p78
        $region14: #{tpu_custom_call.1} parent=11 // pred_check_branch
          %144 = sbr.rel (%p142) target = $region16
        $region15: #{tpu_custom_call.1} parent=11 // pred_region
          _
        $region16: #{tpu_custom_call.1} parent=11 // pred_fallthru
          _
        // Predicated region
        $region17: #{tpu_custom_call.1} parent=11 // pred_check
          %p145 = pneg %p99
        $region18: #{tpu_custom_call.1} parent=11 // pred_check_branch
          %147 = sbr.rel (%p145) target = $region20
        $region19: #{tpu_custom_call.1} parent=11 // pred_region
          _
        $region20: #{tpu_custom_call.1} parent=11 // pred_fallthru
          _
      $region12: #{tpu_custom_call.1} parent=5 // pred_fallthru
        _
      %p148 = scmp.lt.s32.totalorder %s17, 2
      // Predicated region
      $region21: #{tpu_custom_call.1} parent=5 // pred_check
        %p149 = pneg %p148
      $region22: #{tpu_custom_call.1} parent=5 // pred_check_branch
        %151 = sbr.rel (%p149) target = $region24
      $region23: #{tpu_custom_call.1} parent=5 // pred_region
        // Predicated region
        $region25: #{tpu_custom_call.1} parent=23 // pred_check
          %p152 = pneg %p51
        $region26: #{tpu_custom_call.1} parent=23 // pred_check_branch
          %154 = sbr.rel (%p152) target = $region28
        $region27: #{tpu_custom_call.1} parent=23 // pred_region
          %s155 = sand.u32 %s41, 1
          %s156 = scalar_lea.sflag [#allocation4], %s155
          %s157 = sand.u32 %s41, 1
          %s158 = smul.addr %s157, 8
          %s159 = scalar_lea.vmem [#allocation3], %s158
          %s160 = smul.u32 2, %s25
          %s162 = ssub.s32 128, 128
          %163 = vsyncadd %s156, %s162
          %s164 = smul.addr %s24, 2
          %s165 = sadd.s32 %s160, %s164
          %s166 = smul.addr %s165, 64
          %s167 = scalar_lea.hbm %s0, %s166
          %s169 = sshll.u32 %s159, 4
          %s170 = int_to_ptr.vmem [resolvable:$true] %s169
          %172 = dma.hbm_to_vmem [thread:$0]  %s167, 128, %s170, %s156
        $region28: #{tpu_custom_call.1} parent=23 // pred_fallthru
          _
      $region24: #{tpu_custom_call.1} parent=5 // pred_fallthru
        _
      %p173 = scmp.le.s32.totalorder 1, %s17
      %p174 = scmp.lt.s32.totalorder %s17, 3
      %p175 = pnand %p173, %p174
      %p176 = pneg %p175
      // Predicated region
      $region29: #{tpu_custom_call.1} parent=5 // pred_check
        _
      $region30: #{tpu_custom_call.1} parent=5 // pred_check_branch
        %178 = sbr.rel (%p175) target = $region32
      $region31: #{tpu_custom_call.1} parent=5 // pred_region
        %s179 = ssub.s32 %s17, 1
        %s180 = sand.u32 %s44, 1
        %s181 = scalar_lea.sflag [#allocation4], %s180
        %s182 = sand.u32 %s44, 1
        %s183 = smul.addr %s182, 8
        %s184 = scalar_lea.vmem [#allocation3], %s183
        // Predicated region
        $region33: #{tpu_custom_call.1} parent=31 // pred_check
          %p185 = pneg %p57
        $region34: #{tpu_custom_call.1} parent=31 // pred_check_branch
          %187 = sbr.rel (%p185) target = $region36
        $region35: #{tpu_custom_call.1} parent=31 // pred_region
          %188 = dma.done %s181, 128
        $region36: #{tpu_custom_call.1} parent=31 // pred_fallthru
          _
        %s189 = sand.u32 %s44, 1
        %s190 = scalar_lea.sflag [#allocation4], %s189
        %s191 = sand.u32 %s44, 1
        %s192 = smul.addr %s191, 8
        %s193 = scalar_lea.vmem [#allocation3], %s192
        %p194 = pneg %p57
        %p195 = pneg %p54
        %p196 = pneg %p78
        %p197 = pneg %p75
        %p198 = pneg %p99
        %p199 = pneg %p96
        %p200 = pneg %p127
        %p201 = pneg %p124
        %s202 = sand.u32 %s114, 1
        %s203 = scalar_lea.sflag [#allocation5], %s202
        %s204 = sand.u32 %s114, 1
        %s205 = smul.addr %s204, 8
        %s206 = scalar_lea.vmem [#allocation6], %s205
        %s207 = smul.u32 2, %s27
        %s208 = smul.u32 2, %s27
        %v209 = vld [vmem:[%s184] sm:$0xff]
        %v210 = vld [vmem:[%s1] sm:$0xf]
        %212 = vset.pattern.permute.xlu0 0
        %213 = vperm.xlu0 %212, %v210
        %v214 = vpop.permute.xlu0 %213
        %v216 = vunpack.c.l.s4 839922192
        %v217 = vunpack.c.0.s8 %v216
        %v218 = vlaneseq
        %v219 = vshrl.u32 %v218, 7
        %v220 = vsub.s32 %v217, %v219
        %v221 = vrot.slane %v214, %v220
        %v223 = vmul.f32 %v209, %v221
        %v225 = vcombine.high %v223, %v223
        %vm227 = vcmask 1043456
        %v228 = vsel %vm227, %v223, 0.0
        %v229 = vrot.slane %v228, 4
        %v230 = vadd.f32 %v228, %v229
        %v231 = vrot.slane %v230, 2
        %v232 = vadd.f32 %v230, %v231
        %v233 = vrot.slane %v232, 1
        %v234 = vadd.f32 %v232, %v233
        %v235 = vsel %vm227, %v225, 0.0
        %v236 = vrot.slane %v235, 4
        %v237 = vadd.f32 %v235, %v236
        %v238 = vrot.slane %v237, 2
        %v239 = vadd.f32 %v237, %v238
        %v240 = vrot.slane %v239, 1
        %v241 = vadd.f32 %v239, %v240
        %v242 = vld [vmem:[#allocation2] sm:$0x1]
        %s243 = vtos %v242
        %v244 = vstv %s243
        %v245 = vadd.f32 %v234, %v244
        %v246 = vadd.f32 %v241, %v244
        %v247 = vxor.u32 %v245, 2147483648
        %v248 = vxor.u32 %v246, 2147483648
        %v249 = vmul.f32 %v247, 1.442695
        %v250 = vpow.pop %v249
        %v251 = vmul.f32 %v248, 1.442695
        %v252 = vpow.pop %v251
        %v253 = vadd.f32 %v250, 1.0
        %v254 = vadd.f32 %v252, 1.0
        %v255 = vrcp.pop %v253
        %v256 = vmul.f32 1.0, %v255
        %v257 = vrcp.pop %v254
        %v258 = vmul.f32 1.0, %v257
        %v261 = vcombine.low %v256, %v258
        %v263 = vmul.f32 %v209, %v261
        %264 = vst [vmem:[%s206] sm:$0xff] %v263
        %s265 = sand.u32 %s114, 1
        %s266 = scalar_lea.sflag [#allocation5], %s265
        %s267 = sand.u32 %s114, 1
        %s268 = smul.addr %s267, 8
        %s269 = scalar_lea.vmem [#allocation6], %s268
        // Predicated region
        $region37: #{tpu_custom_call.1} parent=31 // pred_check
          %p270 = pneg %p124
        $region38: #{tpu_custom_call.1} parent=31 // pred_check_branch
          %272 = sbr.rel (%p270) target = $region40
        $region39: #{tpu_custom_call.1} parent=31 // pred_region
          %s273 = smul.u32 2, %s27
          %s275 = ssub.s32 128, 128
          %276 = vsyncadd %s266, %s275
          %s277 = smul.addr %s26, 2
          %s278 = sadd.s32 %s273, %s277
          %s279 = smul.addr %s278, 64
          %s280 = scalar_lea.hbm %s3, %s279
          %s282 = sshll.u32 %s269, 4
          %s283 = int_to_ptr.vmem [resolvable:$true] %s282
          %285 = dma.vmem_to_hbm [thread:$0]  %s283, 128, %s280, %s266
        $region40: #{tpu_custom_call.1} parent=31 // pred_fallthru
          _
      $region32: #{tpu_custom_call.1} parent=5 // pred_fallthru
        _
      %p286 = scmp.le.s32.totalorder 2, %s17
      // Predicated region
      $region41: #{tpu_custom_call.1} parent=5 // pred_check
        %p287 = pneg %p286
      $region42: #{tpu_custom_call.1} parent=5 // pred_check_branch
        %289 = sbr.rel (%p287) target = $region44
      $region43: #{tpu_custom_call.1} parent=5 // pred_region
        %s290 = ssub.s32 %s17, 2
        // Predicated region
        $region45: #{tpu_custom_call.1} parent=43 // pred_check
          %p291 = pneg %p130
        $region46: #{tpu_custom_call.1} parent=43 // pred_check_branch
          %293 = sbr.rel (%p291) target = $region48
        $region47: #{tpu_custom_call.1} parent=43 // pred_region
          %s294 = sand.u32 %s115, 1
          %s295 = scalar_lea.sflag [#allocation5], %s294
          %s296 = sand.u32 %s115, 1
          %s297 = smul.addr %s296, 8
          %s298 = scalar_lea.vmem [#allocation6], %s297
          %299 = dma.done %s295, 128
        $region48: #{tpu_custom_call.1} parent=43 // pred_fallthru
          _
      $region44: #{tpu_custom_call.1} parent=5 // pred_fallthru
        _
    $region6: #{tpu_custom_call.1} parent=1 // loop_footer
      %s21 = sadd.s32 1, %s17
    $region7: #{tpu_custom_call.1} parent=1 // loop_footer_branch
      %16 = sbr.rel target = $region3
    $region8: #{tpu_custom_call.1} parent=1 // loop_exit
      _
    %300 = vsyncpa [#allocation4], 1
    %s301 = scalar_lea.sflag [#allocation4], 1
    %302 = vsyncpa %s301, 1
    %303 = vsyncpa [#allocation5], 1
    %s304 = scalar_lea.sflag [#allocation5], 1
    %305 = vsyncpa %s304, 1

</llo_original>
